<compile_context>
chip_gen: v5e
topology: v5e:2x2
jax: 0.10.0
libtpu: 0.0.40
codegen_flags: <defaults>
</compile_context>

<pallas_src>
import jax
import jax.numpy as jnp
from jax.experimental import pallas as pl
from jax.experimental.pallas import tpu as pltpu


_LANE = 128                  # lane width; spatial tiles are multiples of this
_FMA_CIN_THRESHOLD = 8       # c_in below this -> VPU broadcast FMAs, else MXU
_MAX_BATCH_BLOCK = 32        # per-image work is unrolled at trace time
_MIN_STEP_BYTES = 4 << 20    # only split the grid further if steps stay >= this


def _round_up(x, m):
    return (x + m - 1) // m * m


def _largest_divisor_leq(n, cap):
    cap = max(1, min(n, cap))
    for d in range(cap, 0, -1):
        if n % d == 0:
            return d
    return 1


def _vmem_capacity_bytes():
    """Per-TensorCore VMEM capacity; conservative v7x fallback if unknown."""
    try:
        info = pltpu.get_tpu_info()
        cap = getattr(info, "vmem_capacity_bytes", None)
        if cap:
            return int(cap)
    except Exception:
        pass
    return 64 << 20  # v7x per-TC VMEM (smallest of current generations)


def convout_kernel(w_ref, b_ref, x_ref, o_ref):
    """One (batch-block, spatial-tile) grid step of the 1x1 conv.

    w_ref: (C_out, C_in)        full weight matrix, resident every step
    b_ref: (C_out, 1)           bias column
    x_ref: (NB, C_in, TILE_HW)  NB images' spatial tiles (channels on sublanes)
    o_ref: (NB, C_out, TILE_HW) lane-dense output tiles
    """
    w = w_ref[...].astype(jnp.float32)
    b = b_ref[...].astype(jnp.float32)
    c_out, c_in = w.shape
    nb = x_ref.shape[0]

    for i in range(nb):                      # trace-time unroll; nb is small
        x = x_ref[i].astype(jnp.float32)     # (C_in, TILE_HW)
        if c_in < _FMA_CIN_THRESHOLD:
            # Tiny K: a handful of broadcast multiply-adds on the VPU; skips
            # MXU push/pop latency entirely.  Unrolled at trace time.
            acc = w[:, 0:1] * x[0:1, :]
            for ci in range(1, c_in):
                acc = acc + w[:, ci:ci + 1] * x[ci:ci + 1, :]
        else:
            # MXU path: the MXU is otherwise idle in this kernel, so even
            # poorly-utilized K is free and keeps the VALU slot unbound.
            acc = jnp.dot(w, x, preferred_element_type=jnp.float32)
        o_ref[i] = (acc + b).astype(o_ref.dtype)


def conv_out(x_nchw, weight, bias):
    """1x1 conv forward (PyTorch Conv2d semantics).

    x_nchw : (N, C_in, H, W)
    weight : (C_out, C_in, 1, 1)
    bias   : (C_out,)
    returns: (N, C_out, H, W)
    """
    n, c_in, h, w_sp = x_nchw.shape
    c_out = weight.shape[0]
    hw = h * w_sp
    dtype_bytes = jnp.dtype(x_nchw.dtype).itemsize

    hw_padded = _round_up(hw, _LANE)

    # ---- generation-aware VMEM budget -------------------------------------
    vmem_cap = _vmem_capacity_bytes()
    # Scoped-VMEM limit requested from the compiler (v5e/v6e: 64 MiB of 128;
    # v7x: 32 MiB of 64).  Leaves ample headroom for Mosaic internals.
    vmem_limit = int(min(vmem_cap // 2, 96 << 20))
    # Budget for the double-buffered activation (in + out) tiles.
    tile_budget = int(vmem_limit * 0.7)

    # Bytes per spatial column per image (input + output, double-buffered).
    per_col = 2 * (c_in + c_out) * dtype_bytes

    # Largest lane-dense spatial tile that fits the budget for one image and
    # divides hw_padded exactly.
    hw_units = hw_padded // _LANE
    cap_units = max(1, tile_budget // (per_col * _LANE))
    tile_units = _largest_divisor_leq(hw_units, cap_units)
    tile_hw = tile_units * _LANE

    # If a whole image's spatial extent fits in one tile, fold several batch
    # images into the same grid step to amortize per-step DMA/loop overhead.
    nb = 1
    if tile_hw == hw_padded:
        nb_cap = max(1, tile_budget // (per_col * hw_padded))
        nb = _largest_divisor_leq(n, min(nb_cap, _MAX_BATCH_BLOCK))

    # Keep >= 4 grid steps when the problem is big enough (v7x shards the
    # parallel grid across 2 TensorCores) — but never shrink a step below
    # _MIN_STEP_BYTES, where per-step overhead would dominate again.
    def _steps(nb_, thw_):
        return (n // nb_) * (hw_padded // thw_)

    def _step_bytes(nb_, thw_):
        return nb_ * (c_in + c_out) * thw_ * dtype_bytes

    while _steps(nb, tile_hw) < 4:
        cand = None
        if nb > 1:
            nb2 = _largest_divisor_leq(n, nb - 1)
            if nb2 < nb and _step_bytes(nb2, tile_hw) >= _MIN_STEP_BYTES:
                cand = (nb2, tile_hw)
        if cand is None and tile_units > 1:
            tu2 = _largest_divisor_leq(hw_units, tile_units - 1)
            if tu2 < tile_units and _step_bytes(nb, tu2 * _LANE) >= _MIN_STEP_BYTES:
                cand = (nb, tu2 * _LANE)
        if cand is None:
            break
        nb, tile_hw = cand
        tile_units = tile_hw // _LANE

    # ---- NCHW-direct flatten (pure reshape: H, W are trailing dims) -------
    x_flat = x_nchw.reshape(n, c_in, hw)
    w_mat = weight.reshape(c_out, c_in)
    b_col = bias.reshape(c_out, 1)

    if hw_padded != hw:
        # Ragged H*W: pad once (never triggers when H*W % 128 == 0, as here).
        # TODO(synk): handle the ragged last tile in-kernel (masked store) to
        # avoid this extra HBM round trip when padding does trigger.
        x_flat = jnp.pad(x_flat, ((0, 0), (0, 0), (0, hw_padded - hw)))

    grid = (n // nb, hw_padded // tile_hw)

    param_bytes = jnp.dtype(weight.dtype).itemsize
    cost = pl.CostEstimate(
        flops=2 * n * hw * c_in * c_out,
        transcendentals=0,
        bytes_accessed=n * hw_padded * (c_in + c_out) * dtype_bytes
        + (c_in * c_out + c_out) * param_bytes,
    )

    out_flat = pl.pallas_call(
        convout_kernel,
        out_shape=jax.ShapeDtypeStruct((n, c_out, hw_padded), x_nchw.dtype),
        grid_spec=pltpu.PrefetchScalarGridSpec(
            num_scalar_prefetch=0,
            grid=grid,
            in_specs=[
                pl.BlockSpec((c_out, c_in), lambda b, j: (0, 0)),
                pl.BlockSpec((c_out, 1), lambda b, j: (0, 0)),
                pl.BlockSpec((nb, c_in, tile_hw), lambda b, j: (b, 0, j)),
            ],
            out_specs=pl.BlockSpec((nb, c_out, tile_hw),
                                   lambda b, j: (b, 0, j)),
        ),
        compiler_params=pltpu.CompilerParams(
            dimension_semantics=("parallel", "parallel"),
            vmem_limit_bytes=vmem_limit,
        ),
        cost_estimate=cost,
    )(w_mat, b_col, x_flat)

    if hw_padded != hw:
        out_flat = out_flat[:, :, :hw]
    return out_flat.reshape(n, c_out, h, w_sp)


def reference_conv_out(x_nchw, weight, bias):
    """Pure-JAX reference of the 1x1 conv for verification."""
    w_mat = weight.reshape(weight.shape[0], weight.shape[1])   # (C_out, C_in)
    y = jnp.einsum("nchw,oc->nohw", x_nchw, w_mat)
    return y + bias.reshape(1, -1, 1, 1)


if __name__ == "__main__":
    key = jax.random.PRNGKey(0)
    k_x, k_w, k_b = jax.random.split(key, 3)

    # Small shapes consistent with the module: batch=2, in_channels=4,
    # out_channels=8, spatial=16x16.
    N, C_IN, C_OUT, H, W = 2, 4, 8, 16, 16

    x = jax.random.normal(k_x, (N, C_IN, H, W), dtype=jnp.float32)

    # Deterministic synthetic parameter init (PyTorch-style uniform bound).
    bound = 1.0 / (C_IN ** 0.5)
    weight = jax.random.uniform(k_w, (C_OUT, C_IN, 1, 1),
                                minval=-bound, maxval=bound, dtype=jnp.float32)
    bias = jax.random.uniform(k_b, (C_OUT,),
                              minval=-bound, maxval=bound, dtype=jnp.float32)

    out = conv_out(x, weight, bias)
    out = jax.block_until_ready(out)

    ref = reference_conv_out(x, weight, bias)
    assert out.shape == (N, C_OUT, H, W)
    assert jnp.allclose(out, ref, atol=1e-5, rtol=1e-5)

    print("KERNEL_OK")
</pallas_src>

<mosaic_0001>
module attributes {stable_mosaic.version = 11 : i64} {
  func.func @convout_kernel(%arg0: i32, %arg1: i32, %arg2: memref<8x4xf32, #tpu.memory_space<vmem>>, %arg3: memref<8x1xf32, #tpu.memory_space<vmem>>, %arg4: memref<2x4x256xf32, #tpu.memory_space<vmem>>, %arg5: memref<2x8x256xf32, #tpu.memory_space<vmem>>) attributes {dimension_semantics = [#tpu.dimension_semantics<parallel>, #tpu.dimension_semantics<parallel>], iteration_bounds = array<i64: 1, 1>, scalar_prefetch = 0 : i64, scratch_operands = 0 : i64, tpu.core_type = #tpu.core_type<tc>, window_params = [{pipeline_mode = #tpu.pipeline_mode<synchronous>, transform_indices = @transform_0, window_bounds = array<i64: 8, 4>}, {pipeline_mode = #tpu.pipeline_mode<synchronous>, transform_indices = @transform_1, window_bounds = array<i64: 8, 1>}, {transform_indices = @transform_2, window_bounds = array<i64: 2, 4, 256>}, {transform_indices = @transform_3, window_bounds = array<i64: 2, 8, 256>}]} {
    %c0 = arith.constant 0 : index
    %c0_0 = arith.constant 0 : index
    %0 = vector.load %arg2[%c0, %c0_0] : memref<8x4xf32, #tpu.memory_space<vmem>>, vector<8x4xf32>
    %c0_1 = arith.constant 0 : index
    %c0_2 = arith.constant 0 : index
    %1 = vector.load %arg3[%c0_1, %c0_2] : memref<8x1xf32, #tpu.memory_space<vmem>>, vector<8x1xf32>
    %c0_3 = arith.constant 0 : index
    %c0_4 = arith.constant 0 : index
    %c0_5 = arith.constant 0 : index
    %2 = vector.load %arg4[%c0_3, %c0_4, %c0_5] : memref<2x4x256xf32, #tpu.memory_space<vmem>>, vector<1x4x256xf32>
    %3 = vector.shape_cast %2 : vector<1x4x256xf32> to vector<4x256xf32>
    %4 = vector.extract_strided_slice %0 {offsets = [0, 0], sizes = [8, 1], strides = [1, 1]} : vector<8x4xf32> to vector<8x1xf32>
    %5 = vector.extract_strided_slice %3 {offsets = [0, 0], sizes = [1, 256], strides = [1, 1]} : vector<4x256xf32> to vector<1x256xf32>
    %6 = vector.broadcast %4 : vector<8x1xf32> to vector<8x256xf32>
    %7 = vector.broadcast %5 : vector<1x256xf32> to vector<8x256xf32>
    %8 = arith.mulf %6, %7 : vector<8x256xf32>
    %9 = vector.extract_strided_slice %0 {offsets = [0, 1], sizes = [8, 1], strides = [1, 1]} : vector<8x4xf32> to vector<8x1xf32>
    %10 = vector.extract_strided_slice %3 {offsets = [1, 0], sizes = [1, 256], strides = [1, 1]} : vector<4x256xf32> to vector<1x256xf32>
    %11 = vector.broadcast %9 : vector<8x1xf32> to vector<8x256xf32>
    %12 = vector.broadcast %10 : vector<1x256xf32> to vector<8x256xf32>
    %13 = arith.mulf %11, %12 : vector<8x256xf32>
    %14 = arith.addf %8, %13 : vector<8x256xf32>
    %15 = vector.extract_strided_slice %0 {offsets = [0, 2], sizes = [8, 1], strides = [1, 1]} : vector<8x4xf32> to vector<8x1xf32>
    %16 = vector.extract_strided_slice %3 {offsets = [2, 0], sizes = [1, 256], strides = [1, 1]} : vector<4x256xf32> to vector<1x256xf32>
    %17 = vector.broadcast %15 : vector<8x1xf32> to vector<8x256xf32>
    %18 = vector.broadcast %16 : vector<1x256xf32> to vector<8x256xf32>
    %19 = arith.mulf %17, %18 : vector<8x256xf32>
    %20 = arith.addf %14, %19 : vector<8x256xf32>
    %21 = vector.extract_strided_slice %0 {offsets = [0, 3], sizes = [8, 1], strides = [1, 1]} : vector<8x4xf32> to vector<8x1xf32>
    %22 = vector.extract_strided_slice %3 {offsets = [3, 0], sizes = [1, 256], strides = [1, 1]} : vector<4x256xf32> to vector<1x256xf32>
    %23 = vector.broadcast %21 : vector<8x1xf32> to vector<8x256xf32>
    %24 = vector.broadcast %22 : vector<1x256xf32> to vector<8x256xf32>
    %25 = arith.mulf %23, %24 : vector<8x256xf32>
    %26 = arith.addf %20, %25 : vector<8x256xf32>
    %27 = vector.broadcast %1 : vector<8x1xf32> to vector<8x256xf32>
    %28 = arith.addf %26, %27 : vector<8x256xf32>
    %c0_6 = arith.constant 0 : index
    %c0_7 = arith.constant 0 : index
    %c0_8 = arith.constant 0 : index
    %29 = vector.load %arg5[%c0_6, %c0_7, %c0_8] : memref<2x8x256xf32, #tpu.memory_space<vmem>>, vector<1x8x256xf32>
    %30 = vector.shape_cast %29 : vector<1x8x256xf32> to vector<8x256xf32>
    %31 = vector.shape_cast %28 : vector<8x256xf32> to vector<1x8x256xf32>
    tpu.vector_store %arg5[%c0_6, %c0_7, %c0_8], %31 {strides = array<i32>} : memref<2x8x256xf32, #tpu.memory_space<vmem>>, vector<1x8x256xf32>,
    %c1 = arith.constant 1 : index
    %c0_9 = arith.constant 0 : index
    %c0_10 = arith.constant 0 : index
    %32 = vector.load %arg4[%c1, %c0_9, %c0_10] : memref<2x4x256xf32, #tpu.memory_space<vmem>>, vector<1x4x256xf32>
    %33 = vector.shape_cast %32 : vector<1x4x256xf32> to vector<4x256xf32>
    %34 = vector.extract_strided_slice %0 {offsets = [0, 0], sizes = [8, 1], strides = [1, 1]} : vector<8x4xf32> to vector<8x1xf32>
    %35 = vector.extract_strided_slice %33 {offsets = [0, 0], sizes = [1, 256], strides = [1, 1]} : vector<4x256xf32> to vector<1x256xf32>
    %36 = vector.broadcast %34 : vector<8x1xf32> to vector<8x256xf32>
    %37 = vector.broadcast %35 : vector<1x256xf32> to vector<8x256xf32>
    %38 = arith.mulf %36, %37 : vector<8x256xf32>
    %39 = vector.extract_strided_slice %0 {offsets = [0, 1], sizes = [8, 1], strides = [1, 1]} : vector<8x4xf32> to vector<8x1xf32>
    %40 = vector.extract_strided_slice %33 {offsets = [1, 0], sizes = [1, 256], strides = [1, 1]} : vector<4x256xf32> to vector<1x256xf32>
    %41 = vector.broadcast %39 : vector<8x1xf32> to vector<8x256xf32>
    %42 = vector.broadcast %40 : vector<1x256xf32> to vector<8x256xf32>
    %43 = arith.mulf %41, %42 : vector<8x256xf32>
    %44 = arith.addf %38, %43 : vector<8x256xf32>
    %45 = vector.extract_strided_slice %0 {offsets = [0, 2], sizes = [8, 1], strides = [1, 1]} : vector<8x4xf32> to vector<8x1xf32>
    %46 = vector.extract_strided_slice %33 {offsets = [2, 0], sizes = [1, 256], strides = [1, 1]} : vector<4x256xf32> to vector<1x256xf32>
    %47 = vector.broadcast %45 : vector<8x1xf32> to vector<8x256xf32>
    %48 = vector.broadcast %46 : vector<1x256xf32> to vector<8x256xf32>
    %49 = arith.mulf %47, %48 : vector<8x256xf32>
    %50 = arith.addf %44, %49 : vector<8x256xf32>
    %51 = vector.extract_strided_slice %0 {offsets = [0, 3], sizes = [8, 1], strides = [1, 1]} : vector<8x4xf32> to vector<8x1xf32>
    %52 = vector.extract_strided_slice %33 {offsets = [3, 0], sizes = [1, 256], strides = [1, 1]} : vector<4x256xf32> to vector<1x256xf32>
    %53 = vector.broadcast %51 : vector<8x1xf32> to vector<8x256xf32>
    %54 = vector.broadcast %52 : vector<1x256xf32> to vector<8x256xf32>
    %55 = arith.mulf %53, %54 : vector<8x256xf32>
    %56 = arith.addf %50, %55 : vector<8x256xf32>
    %57 = vector.broadcast %1 : vector<8x1xf32> to vector<8x256xf32>
    %58 = arith.addf %56, %57 : vector<8x256xf32>
    %c1_11 = arith.constant 1 : index
    %c0_12 = arith.constant 0 : index
    %c0_13 = arith.constant 0 : index
    %59 = vector.load %arg5[%c1_11, %c0_12, %c0_13] : memref<2x8x256xf32, #tpu.memory_space<vmem>>, vector<1x8x256xf32>
    %60 = vector.shape_cast %59 : vector<1x8x256xf32> to vector<8x256xf32>
    %61 = vector.shape_cast %58 : vector<8x256xf32> to vector<1x8x256xf32>
    tpu.vector_store %arg5[%c1_11, %c0_12, %c0_13], %61 {strides = array<i32>} : memref<2x8x256xf32, #tpu.memory_space<vmem>>, vector<1x8x256xf32>,
    return
  }
  func.func @transform_0(%arg0: i32, %arg1: i32) -> (i32, i32) {
    %c0_i32 = arith.constant 0 : i32
    %c0_i32_0 = arith.constant 0 : i32
    %c0_i32_1 = arith.constant 0 : i32
    return %c0_i32, %c0_i32_0 : i32, i32
  }
  func.func @transform_1(%arg0: i32, %arg1: i32) -> (i32, i32) {
    %c0_i32 = arith.constant 0 : i32
    %c0_i32_0 = arith.constant 0 : i32
    %c0_i32_1 = arith.constant 0 : i32
    return %c0_i32, %c0_i32_0 : i32, i32
  }
  func.func @transform_2(%arg0: i32, %arg1: i32) -> (i32, i32, i32) {
    %c0_i32 = arith.constant 0 : i32
    %c0_i32_0 = arith.constant 0 : i32
    return %arg0, %c0_i32, %arg1 : i32, i32, i32
  }
  func.func @transform_3(%arg0: i32, %arg1: i32) -> (i32, i32, i32) {
    %c0_i32 = arith.constant 0 : i32
    %c0_i32_0 = arith.constant 0 : i32
    return %arg0, %c0_i32, %arg1 : i32, i32, i32
  }
}

</mosaic_0001>

<llo_original>
// kernel: tpu_custom_call.1
$region0: #{tpu_custom_call.1}
  #allocation0 [shape = 'u32[]', space=smem, size = 0x4, offset = 0x4, fixed_abs, tag = 'smem constant byte address 0x4 - core index']
  #allocation1 [shape = 'u32[72,128]{1,0:T(1,128)}', space=vmem, size = 0x9000, scoped, tag = 'internal scratch']
  %s0 = inlined_call_operand.vmem [shape: f32[8,4], index: 0, kind: input, shape index: {}]
  %s1 = inlined_call_operand.vmem [shape: f32[8,1], index: 1, kind: input, shape index: {}]
  %s2 = inlined_call_operand.vmem [shape: f32[2,4,256], index: 2, kind: input, shape index: {}]
  %s3 = inlined_call_operand.hbm [shape: f32[2,8,256], index: 3, kind: output, shape index: {}]
  %s4 = sld [smem:[#allocation0]]
  $region22: #{tpu_custom_call.1} parent=0
    _
  %s6 = ssub.s32 1, %s4
  %s7 = scalar_select 0, %s6, %s4
  $region1: #{tpu_custom_call.1} parent=0
    #allocation2 [shape = 'u8[16384]{0}', space=vmem, size = 0x4000, scoped, tag = 'output window, operand 0, single buffered']
    #allocation3 [shape = 's32[1]{0}', space=sflag, size = 0x4, scoped, tag = 'scoped memory for tpu_custom_call.1']
    %8 = vsyncpa [#allocation3], 0
    // Predicated region
    $region2: #{tpu_custom_call.1} parent=1 // pred_check
      _
    $region3: #{tpu_custom_call.1} parent=1 // pred_check_branch
      %10 = sbr.rel (0) target = $region5
    $region4: #{tpu_custom_call.1} parent=1 // pred_region
      _
    $region5: #{tpu_custom_call.1} parent=1 // pred_fallthru
      _
    // Predicated region
    $region6: #{tpu_custom_call.1} parent=1 // pred_check
      _
    $region7: #{tpu_custom_call.1} parent=1 // pred_check_branch
      %12 = sbr.rel (0) target = $region9
    $region8: #{tpu_custom_call.1} parent=1 // pred_region
      _
    $region9: #{tpu_custom_call.1} parent=1 // pred_fallthru
      _
    // Predicated region
    $region10: #{tpu_custom_call.1} parent=1 // pred_check
      _
    $region11: #{tpu_custom_call.1} parent=1 // pred_check_branch
      %14 = sbr.rel (0) target = $region13
    $region12: #{tpu_custom_call.1} parent=1 // pred_region
      _
    $region13: #{tpu_custom_call.1} parent=1 // pred_fallthru
      _
    %v15 = vld [vmem:[%s0] sm:$0xff]
    %v16 = vld [vmem:[%s1] sm:$0xff]
    %v17 = vld [vmem:[%s2] sm:$0xff]
    %19 = vset.pattern.permute.xlu0 0
    %20 = vperm.xlu0 %19, %v15
    %v21 = vpop.permute.xlu0 %20
    %v24 = vperm.slane %v17, 0
    %v25 = vperm.slane %v17, 4
    %v28 = vperm.slane %v24, 0
    %v29 = vperm.slane %v25, 0
    %v30 = vmul.f32 %v21, %v28
    %v31 = vmul.f32 %v21, %v29
    %32 = vset.pattern.permute.xlu0 1
    %33 = vperm.xlu0 %32, %v15
    %v34 = vpop.permute.xlu0 %33
    %v36 = vperm.slane %v17, 1
    %v37 = vperm.slane %v17, 5
    %v40 = vperm.slane %v36, 1
    %v41 = vperm.slane %v37, 1
    %v42 = vmul.f32 %v34, %v40
    %v43 = vmul.f32 %v34, %v41
    %v44 = vadd.f32 %v30, %v42
    %v45 = vadd.f32 %v31, %v43
    %46 = vset.pattern.permute.xlu0 2
    %47 = vperm.xlu0 %46, %v15
    %v48 = vpop.permute.xlu0 %47
    %v50 = vperm.slane %v17, 2
    %v51 = vperm.slane %v17, 6
    %v54 = vperm.slane %v50, 2
    %v55 = vperm.slane %v51, 2
    %v56 = vmul.f32 %v48, %v54
    %v57 = vmul.f32 %v48, %v55
    %v58 = vadd.f32 %v44, %v56
    %v59 = vadd.f32 %v45, %v57
    %60 = vset.pattern.permute.xlu0 3
    %61 = vperm.xlu0 %60, %v15
    %v62 = vpop.permute.xlu0 %61
    %v64 = vperm.slane %v17, 3
    %v65 = vperm.slane %v17, 7
    %v68 = vperm.slane %v64, 3
    %v69 = vperm.slane %v65, 3
    %v70 = vmul.f32 %v62, %v68
    %v71 = vmul.f32 %v62, %v69
    %v72 = vadd.f32 %v58, %v70
    %v73 = vadd.f32 %v59, %v71
    %75 = vset.pattern.permute.xlu0 0
    %76 = vperm.xlu0 %75, %v16
    %v77 = vpop.permute.xlu0 %76
    %v79 = vadd.f32 %v72, %v77
    %v80 = vadd.f32 %v73, %v77
    %81 = vst [vmem:[#allocation2] sm:$0xff] %v79
    %82 = vst [vmem:[#allocation2 + $0x8] sm:$0xff] %v80
    %s83 = scalar_lea.vmem %s2, 8
    %v84 = vld [vmem:[%s83] sm:$0xff]
    %v86 = vperm.slane %v84, 0
    %v87 = vperm.slane %v84, 4
    %v90 = vperm.slane %v86, 0
    %v91 = vperm.slane %v87, 0
    %v92 = vmul.f32 %v21, %v90
    %v93 = vmul.f32 %v21, %v91
    %v94 = vperm.slane %v84, 1
    %v95 = vperm.slane %v84, 5
    %v98 = vperm.slane %v94, 1
    %v99 = vperm.slane %v95, 1
    %v100 = vmul.f32 %v34, %v98
    %v101 = vmul.f32 %v34, %v99
    %v102 = vadd.f32 %v92, %v100
    %v103 = vadd.f32 %v93, %v101
    %v104 = vperm.slane %v84, 2
    %v105 = vperm.slane %v84, 6
    %v108 = vperm.slane %v104, 2
    %v109 = vperm.slane %v105, 2
    %v110 = vmul.f32 %v48, %v108
    %v111 = vmul.f32 %v48, %v109
    %v112 = vadd.f32 %v102, %v110
    %v113 = vadd.f32 %v103, %v111
    %v114 = vperm.slane %v84, 3
    %v115 = vperm.slane %v84, 7
    %v118 = vperm.slane %v114, 3
    %v119 = vperm.slane %v115, 3
    %v120 = vmul.f32 %v62, %v118
    %v121 = vmul.f32 %v62, %v119
    %v122 = vadd.f32 %v112, %v120
    %v123 = vadd.f32 %v113, %v121
    %v124 = vadd.f32 %v122, %v77
    %v125 = vadd.f32 %v123, %v77
    %s126 = scalar_lea.vmem [#allocation2], 16
    %127 = vst [vmem:[%s126] sm:$0xff] %v124
    %128 = vst [vmem:[%s126 + $0x8] sm:$0xff] %v125
    // Predicated region
    $region14: #{tpu_custom_call.1} parent=1 // pred_check
      _
    $region15: #{tpu_custom_call.1} parent=1 // pred_check_branch
      %130 = sbr.rel (0) target = $region17
    $region16: #{tpu_custom_call.1} parent=1 // pred_region
      %132 = vsyncadd [#allocation3], 0
      %s133 = sshll.u32 [#allocation2], 4
      %s134 = int_to_ptr.vmem [resolvable:$true] %s133
      %s135 = sshll.u32 %s3, 4
      %s136 = int_to_ptr.hbm [resolvable:$true] %s135
      %141 = dma.vmem_to_hbm [thread:$0]  %s134, 512, %s136, [#allocation3], 256, 256, 16
    $region17: #{tpu_custom_call.1} parent=1 // pred_fallthru
      _
    // Predicated region
    $region18: #{tpu_custom_call.1} parent=1 // pred_check
      _
    $region19: #{tpu_custom_call.1} parent=1 // pred_check_branch
      %143 = sbr.rel (0) target = $region21
    $region20: #{tpu_custom_call.1} parent=1 // pred_region
      %145 = dma.done [#allocation3], 512
    $region21: #{tpu_custom_call.1} parent=1 // pred_fallthru
      _
    %146 = vsyncpa [#allocation3], 1

</llo_original>
